<compile_context>
chip_gen: v7x
topology: tpu7x:2x2x1
jax: 0.10.0
libtpu: 0.0.40
codegen_flags: <defaults>
</compile_context>

<pallas_src>
import jax
import jax.numpy as jnp
import numpy as np
from jax import lax
from jax.experimental import pallas as pl
from jax.experimental.pallas import tpu as pltpu

_KK_THRESH = 1.0e6


def _round_up(x, m):
    return ((x + m - 1) // m) * m


def _vmem_capacity_bytes():
    """Per-core physical VMEM; conservative fallback (v7x) if the query fails."""
    try:
        return int(pltpu.get_tpu_info().vmem_capacity_bytes)
    except Exception:
        return 64 << 20


def _make_conv_kernel(NB, H, K, WpCin, WCp):
    """Per grid step: NB images, each = K accumulating lane-dense MXU matmuls."""

    def kernel(w_ref, x_ref, o_ref):
        # w_ref: (K, Wp*Cin, WCp) bf16   x_ref: (NB, Hp, Wp*Cin) bf16
        # o_ref: (NB, H, WCp) f32
        for n in range(NB):                       # NB <= 8 by construction
            acc = jnp.zeros((H, WCp), jnp.float32)
            for kh in range(K):                   # K small; static slices only
                slab = x_ref[n, kh:kh + H, :]     # (H, Wp*Cin), plain sublane slice
                acc = acc + jnp.dot(slab, w_ref[kh],
                                    preferred_element_type=jnp.float32)
            o_ref[n] = acc                        # single lane-dense store per image

    return kernel


def _pick_batch_block(N, H, Hp, WpCin, WCp, K, budget_bytes, max_nb=8):
    """Largest divisor of N (<= max_nb) fitting the budget, with >=2 grid steps
    when N >= 2 (keeps both v7x TensorCores busy and enables pipelining)."""

    def footprint(nb):
        xb = nb * _round_up(Hp, 16) * _round_up(WpCin, 128) * 2   # bf16 x block (tile-padded)
        wb = K * _round_up(WpCin, 16) * WCp * 2                   # bf16 weight operand
        ob = nb * _round_up(H, 8) * WCp * 4                       # f32 output block
        ac = _round_up(H, 8) * WCp * 4                            # live f32 accumulator
        return 2 * xb + 2 * wb + 2 * ob + ac                      # incl. double buffering

    min_steps = 2 if N >= 2 else 1
    nb = min(N, max_nb)
    while nb > 1 and (N % nb != 0 or N // nb < min_steps
                      or footprint(nb) > budget_bytes):
        nb -= 1
    assert footprint(nb) <= budget_bytes, (
        "BinaryConv2DCL Pallas kernel: a single-image block exceeds the VMEM "
        "budget; this shape would need spatial tiling.")
    return nb


def binary_conv2d_cl(x_nchw, weight_oihw, kk, nmk):
    """x: (N, Cin, H, W) f32; weight: (Cout, Cin, K, K) f32.
    Returns (out (N, Cout, H, W) f32, reg_loss scalar f32)."""
    N, Cin, H, W = x_nchw.shape
    Cout, Cin2, K, K2 = weight_oihw.shape
    assert Cin2 == Cin and K2 == K
    # PyTorch padding='same' pads asymmetrically for even K; assume odd K.
    assert K % 2 == 1, "BinaryConv2DCL Pallas kernel assumes odd ker_size"
    pad = K // 2
    Hp, Wp = H + 2 * pad, W + 2 * pad
    WpCin = Wp * Cin
    WCout = W * Cout
    WCp = _round_up(WCout, 128)                 # lane-dense output width

    kk = jnp.asarray(kk, jnp.float32)
    nmk = jnp.asarray(nmk, jnp.float32)

    # ---- Weight prep in plain jnp (tiny tensor; a dedicated single-step
    # pallas_call costs more in launch + HBM round trip than it saves). ----
    w_eff = jnp.where(kk < _KK_THRESH, jnp.tanh(weight_oihw * kk),
                      jnp.sign(weight_oihw))                     # (Cout,Cin,K,K) f32
    reg_loss = 0.2 * jnp.sum(jnp.maximum(jnp.abs(weight_oihw) - 0.2, 0.0) ** 2)

    # (kh, kw, cin, cout) order, nmk folded into the weights (free VPU relief).
    w_khwc = jnp.transpose(w_eff, (2, 3, 1, 0)) * nmk            # (K, K, Cin, Cout)

    # Width-folded matmul operand:
    #   Wmat[kh, (j+kw)*Cin + c, j*Cout + o] = w_khwc[kh, kw, c, o], else 0.
    rows = jnp.arange(WpCin)
    cols = jnp.arange(WCout)
    jw, c = rows // Cin, rows % Cin
    j, o = cols // Cout, cols % Cout
    kw = jw[:, None] - j[None, :]                                # (WpCin, WCout)
    valid = (kw >= 0) & (kw < K)
    kw_c = jnp.clip(kw, 0, K - 1)
    wmat = jnp.where(valid[None, :, :],
                     w_khwc[:, kw_c, c[:, None], o[None, :]], 0.0)  # (K, WpCin, WCout)
    wmat = jnp.pad(wmat, ((0, 0), (0, 0), (0, WCp - WCout))).astype(jnp.bfloat16)

    # ---- Activations: NCHW -> NHWC, 'same' halo pad, fold (W, Cin) into the
    # minor dim (lane-dense kernel loads), bf16 cast — one layout pass. ----
    x_fold = jnp.pad(jnp.transpose(x_nchw, (0, 2, 3, 1)),
                     ((0, 0), (pad, pad), (pad, pad), (0, 0)))
    x_fold = x_fold.reshape(N, Hp, WpCin).astype(jnp.bfloat16)

    # ---- Generation-aware VMEM budget and batch-block choice. ----
    cap = _vmem_capacity_bytes()
    budget = int(cap * 0.70)                    # ~90 MiB v5e/v6e, ~45 MiB v7x
    NB = _pick_batch_block(N, H, Hp, WpCin, WCp, K, budget)
    vmem_limit = min(int(cap * 0.90), 128 << 20)

    conv_kernel = _make_conv_kernel(NB, H, K, WpCin, WCp)

    out3 = pl.pallas_call(
        conv_kernel,
        out_shape=jax.ShapeDtypeStruct((N, H, WCp), jnp.float32),
        grid_spec=pltpu.PrefetchScalarGridSpec(
            num_scalar_prefetch=0,
            grid=(N // NB,),
            in_specs=[
                pl.BlockSpec((K, WpCin, WCp), lambda i: (0, 0, 0)),   # folded weights
                pl.BlockSpec((NB, Hp, WpCin), lambda i: (i, 0, 0)),   # folded, padded x
            ],
            out_specs=pl.BlockSpec((NB, H, WCp), lambda i: (i, 0, 0)),
        ),
        compiler_params=pltpu.CompilerParams(
            dimension_semantics=("parallel",),
            vmem_limit_bytes=vmem_limit),
    )(wmat, x_fold)

    # Wrapper-side layout glue: drop lane padding (none when W*Cout % 128 == 0),
    # un-fold width/channels, back to NCHW.
    out_nhwc = out3[:, :, :WCout].reshape(N, H, W, Cout)
    out_nchw = jnp.transpose(out_nhwc, (0, 3, 1, 2))
    return out_nchw, reg_loss


def _reference(x_nchw, weight_oihw, kk, nmk):
    """Pure-JAX reference matching the PyTorch forward."""
    w_eff = jnp.where(kk < _KK_THRESH, jnp.tanh(weight_oihw * kk),
                      jnp.sign(weight_oihw))
    out = lax.conv_general_dilated(
        x_nchw, w_eff, window_strides=(1, 1), padding="SAME",
        dimension_numbers=("NCHW", "OIHW", "NCHW"))
    reg = 0.2 * jnp.sum(jnp.maximum(jnp.abs(weight_oihw) - 0.2, 0.0) ** 2)
    return nmk * out, reg


if __name__ == "__main__":
    key = jax.random.PRNGKey(0)
    k_x, k_w = jax.random.split(key)

    # small shapes consistent with the module
    N, Cin, Cout, H, W, K = 2, 4, 8, 16, 16, 3

    x = jax.random.normal(k_x, (N, Cin, H, W), dtype=jnp.float32)
    # nn.init.uniform_(weight, -0.1, 0.1)
    weight = jax.random.uniform(k_w, (Cout, Cin, K, K), dtype=jnp.float32,
                                minval=-0.1, maxval=0.1)
    nmk = jnp.float32(1.0)   # nn.Parameter([1.0])
    kk = jnp.float32(1.0)    # non-trainable buffer, default 1.0 (< 1e6 -> tanh)

    out, reg_loss = binary_conv2d_cl(x, weight, kk, nmk)
    out = jax.block_until_ready(out)
    reg_loss = jax.block_until_ready(reg_loss)

    ref_out, ref_reg = _reference(x, weight, kk, nmk)
    # bf16 MXU operands (f32 accumulation) -> slightly loosened tolerance.
    np.testing.assert_allclose(np.asarray(out), np.asarray(ref_out),
                               rtol=5e-2, atol=3e-2)
    np.testing.assert_allclose(np.asarray(reg_loss), np.asarray(ref_reg),
                               rtol=1e-4, atol=1e-6)

    print("KERNEL_OK")
</pallas_src>

<mosaic_0001>
module attributes {stable_mosaic.version = 11 : i64} {
  func.func @kernel(%arg0: i32, %arg1: memref<3x72x128xbf16, #tpu.memory_space<vmem>>, %arg2: memref<1x18x72xbf16, #tpu.memory_space<vmem>>, %arg3: memref<1x16x128xf32, #tpu.memory_space<vmem>>) attributes {dimension_semantics = [#tpu.dimension_semantics<parallel>], iteration_bounds = array<i64: 2>, scalar_prefetch = 0 : i64, scratch_operands = 0 : i64, tpu.core_type = #tpu.core_type<tc>, window_params = [{pipeline_mode = #tpu.pipeline_mode<synchronous>, transform_indices = @transform_0, window_bounds = array<i64: 3, 72, 128>}, {transform_indices = @transform_1, window_bounds = array<i64: 1, 18, 72>}, {transform_indices = @transform_2, window_bounds = array<i64: 1, 16, 128>}]} {
    %cst = arith.constant 0.000000e+00 : f32
    %0 = vector.broadcast %cst : f32 to vector<16x128xf32>
    %c0 = arith.constant 0 : index
    %c0_0 = arith.constant 0 : index
    %c0_1 = arith.constant 0 : index
    %1 = vector.load %arg2[%c0, %c0_0, %c0_1] : memref<1x18x72xbf16, #tpu.memory_space<vmem>>, vector<1x16x72xbf16>
    %2 = vector.shape_cast %1 : vector<1x16x72xbf16> to vector<16x72xbf16>
    %c0_2 = arith.constant 0 : index
    %c0_3 = arith.constant 0 : index
    %c0_4 = arith.constant 0 : index
    %3 = vector.load %arg1[%c0_2, %c0_3, %c0_4] : memref<3x72x128xbf16, #tpu.memory_space<vmem>>, vector<1x72x128xbf16>
    %4 = vector.shape_cast %3 : vector<1x72x128xbf16> to vector<72x128xbf16>
    %cst_5 = arith.constant dense<0.000000e+00> : vector<16x128xf32>
    %5 = tpu.matmul %2, %4, %cst_5 {dimension_numbers = #tpu.dot_dimension_numbers<[1], [0], [0], [1], [0, 0, 1, 1], [], []>} : vector<16x72xbf16>, vector<72x128xbf16>, vector<16x128xf32> -> vector<16x128xf32>
    %6 = arith.addf %0, %5 : vector<16x128xf32>
    %c0_6 = arith.constant 0 : index
    %c1 = arith.constant 1 : index
    %c0_7 = arith.constant 0 : index
    %7 = vector.load %arg2[%c0_6, %c1, %c0_7] : memref<1x18x72xbf16, #tpu.memory_space<vmem>>, vector<1x16x72xbf16>
    %8 = vector.shape_cast %7 : vector<1x16x72xbf16> to vector<16x72xbf16>
    %c1_8 = arith.constant 1 : index
    %c0_9 = arith.constant 0 : index
    %c0_10 = arith.constant 0 : index
    %9 = vector.load %arg1[%c1_8, %c0_9, %c0_10] : memref<3x72x128xbf16, #tpu.memory_space<vmem>>, vector<1x72x128xbf16>
    %10 = vector.shape_cast %9 : vector<1x72x128xbf16> to vector<72x128xbf16>
    %cst_11 = arith.constant dense<0.000000e+00> : vector<16x128xf32>
    %11 = tpu.matmul %8, %10, %cst_11 {dimension_numbers = #tpu.dot_dimension_numbers<[1], [0], [0], [1], [0, 0, 1, 1], [], []>} : vector<16x72xbf16>, vector<72x128xbf16>, vector<16x128xf32> -> vector<16x128xf32>
    %12 = arith.addf %6, %11 : vector<16x128xf32>
    %c0_12 = arith.constant 0 : index
    %c2 = arith.constant 2 : index
    %c0_13 = arith.constant 0 : index
    %13 = vector.load %arg2[%c0_12, %c2, %c0_13] : memref<1x18x72xbf16, #tpu.memory_space<vmem>>, vector<1x16x72xbf16>
    %14 = vector.shape_cast %13 : vector<1x16x72xbf16> to vector<16x72xbf16>
    %c2_14 = arith.constant 2 : index
    %c0_15 = arith.constant 0 : index
    %c0_16 = arith.constant 0 : index
    %15 = vector.load %arg1[%c2_14, %c0_15, %c0_16] : memref<3x72x128xbf16, #tpu.memory_space<vmem>>, vector<1x72x128xbf16>
    %16 = vector.shape_cast %15 : vector<1x72x128xbf16> to vector<72x128xbf16>
    %cst_17 = arith.constant dense<0.000000e+00> : vector<16x128xf32>
    %17 = tpu.matmul %14, %16, %cst_17 {dimension_numbers = #tpu.dot_dimension_numbers<[1], [0], [0], [1], [0, 0, 1, 1], [], []>} : vector<16x72xbf16>, vector<72x128xbf16>, vector<16x128xf32> -> vector<16x128xf32>
    %18 = arith.addf %12, %17 : vector<16x128xf32>
    %c0_18 = arith.constant 0 : index
    %c0_19 = arith.constant 0 : index
    %c0_20 = arith.constant 0 : index
    %19 = vector.load %arg3[%c0_18, %c0_19, %c0_20] : memref<1x16x128xf32, #tpu.memory_space<vmem>>, vector<1x16x128xf32>
    %20 = vector.shape_cast %19 : vector<1x16x128xf32> to vector<16x128xf32>
    %21 = vector.shape_cast %18 : vector<16x128xf32> to vector<1x16x128xf32>
    tpu.vector_store %arg3[%c0_18, %c0_19, %c0_20], %21 {strides = array<i32>} : memref<1x16x128xf32, #tpu.memory_space<vmem>>, vector<1x16x128xf32>,
    return
  }
  func.func @transform_0(%arg0: i32) -> (i32, i32, i32) {
    %c0_i32 = arith.constant 0 : i32
    %c0_i32_0 = arith.constant 0 : i32
    %c0_i32_1 = arith.constant 0 : i32
    %c0_i32_2 = arith.constant 0 : i32
    return %c0_i32, %c0_i32_0, %c0_i32_1 : i32, i32, i32
  }
  func.func @transform_1(%arg0: i32) -> (i32, i32, i32) {
    %c0_i32 = arith.constant 0 : i32
    %c0_i32_0 = arith.constant 0 : i32
    %c0_i32_1 = arith.constant 0 : i32
    return %arg0, %c0_i32, %c0_i32_0 : i32, i32, i32
  }
  func.func @transform_2(%arg0: i32) -> (i32, i32, i32) {
    %c0_i32 = arith.constant 0 : i32
    %c0_i32_0 = arith.constant 0 : i32
    %c0_i32_1 = arith.constant 0 : i32
    return %arg0, %c0_i32, %c0_i32_0 : i32, i32, i32
  }
}

</mosaic_0001>

<llo_original>
// kernel: tpu_custom_call.1
$region0: #{tpu_custom_call.1}
  #allocation0 [shape = 'u32[]', space=smem, size = 0x4, offset = 0x4, fixed_abs, tag = 'smem constant byte address 0x4 - core index']
  #allocation1 [shape = 'u32[144,128]{1,0:T(1,128)}', space=vmem, size = 0x12000, scoped, tag = 'internal scratch']
  %s0 = inlined_call_operand.hbm [shape: bf16[3,72,128], index: 0, kind: input, shape index: {}]
  %s1 = inlined_call_operand.vmem [shape: bf16[2,18,72], index: 1, kind: input, shape index: {}]
  %s2 = inlined_call_operand.hbm [shape: f32[2,16,128], index: 2, kind: output, shape index: {}]
  %s3 = sld [smem:[#allocation0]]
  $region45: #{tpu_custom_call.1} parent=0
    _
  %s5 = ssub.s32 1, %s3
  %s6 = scalar_select 0, %s5, %s3
  $region1: #{tpu_custom_call.1} parent=0
    #allocation2 [shape = 'u8[55296]{0}', space=vmem, size = 0xd800, scoped, tag = 'input window, operand 0, single buffered']
    #allocation3 [shape = 's32[2]{0}', space=sflag, size = 0x8, scoped, tag = 'scoped memory for tpu_custom_call.1']
    #allocation4 [shape = 's32[2]{0}', space=sflag, size = 0x8, scoped, tag = 'scoped memory for tpu_custom_call.1']
    #allocation5 [shape = 'u8[16384]{0}', space=vmem, size = 0x4000, scoped, tag = 'output window, operand 0']
    %7 = vsyncpa [#allocation3], 0
    %8 = vsyncpa [#allocation4], 0
    %s9 = scalar_lea.sflag [#allocation4], 1
    %10 = vsyncpa %s9, 0
    loop: start=0, step=1, limit=4
    $region2: #{tpu_custom_call.1} parent=1 // loop_pre_header
      _
    $region3: #{tpu_custom_call.1} parent=1 // loop_header
      %s12 = sphi 0, %s16
      %p13 = scmp.ge.s32.totalorder %s12, 4
      %s20 = sphi 0, %s20
      %s22 = sphi 0, %s20
      %s23 = sphi 0, %s22
      %s37 = sphi 0, %s23
      %s43 = sphi 0, %s45
      %s46 = sphi 0, %s43
      %s47 = sphi 0, %s46
      %s63 = sphi 0, %s47
      %s69 = sphi 0, %s71
      %s72 = sphi 0, %s69
      %s73 = sphi 0, %s72
      %s89 = sphi 0, %s73
    $region4: #{tpu_custom_call.1} parent=1 // loop_header_branch
      %15 = sbr.rel (%p13) target = $region8
    $region5: #{tpu_custom_call.1} parent=1 // loop_body
      %s17 = ssub.s32 %s12, 1
      %s18 = ssub.s32 %s12, 2
      %s19 = sadd.s32 %s12, 1
      %s21 = sadd.s32 %s20, 1
      %p24 = scmp.eq.s32.totalorder %s12, 1
      %p25 = scmp.ne.s32.totalorder %s20, %s22
      %p26 = scmp.eq.s32.totalorder %s12, 0
      %p27 = por %p25, %p26
      %p28 = scmp.ne.s32.totalorder %s20, %s22
      %p29 = scmp.eq.s32.totalorder %s17, 1
      %p30 = por %p28, %p29
      %p31 = scmp.ne.s32.totalorder %s22, %s23
      %p32 = scmp.eq.s32.totalorder %s17, 0
      %p33 = por %p31, %p32
      %p34 = scmp.ne.s32.totalorder %s22, %s23
      %p35 = scmp.eq.s32.totalorder %s18, 1
      %p36 = por %p34, %p35
      %p38 = scmp.ne.s32.totalorder %s23, %s37
      %p39 = scmp.eq.s32.totalorder %s18, 0
      %p40 = por %p38, %p39
      %s41 = ssub.s32 %s12, %s19
      %p42 = scmp.eq.s32.totalorder %s41, 0
      %s44 = sadd.s32 %s43, 1
      %s45 = scalar_select %p42, %s43, %s44
      %p48 = pneg %p42
      %p49 = scmp.eq.s32.totalorder %s12, 1
      %p50 = por %p48, %p49
      %p51 = scmp.ne.s32.totalorder %s43, %s46
      %p52 = scmp.eq.s32.totalorder %s12, 0
      %p53 = por %p51, %p52
      %p54 = scmp.ne.s32.totalorder %s43, %s46
      %p55 = scmp.eq.s32.totalorder %s17, 1
      %p56 = por %p54, %p55
      %p57 = scmp.ne.s32.totalorder %s46, %s47
      %p58 = scmp.eq.s32.totalorder %s17, 0
      %p59 = por %p57, %p58
      %p60 = scmp.ne.s32.totalorder %s46, %s47
      %p61 = scmp.eq.s32.totalorder %s18, 1
      %p62 = por %p60, %p61
      %p64 = scmp.ne.s32.totalorder %s47, %s63
      %p65 = scmp.eq.s32.totalorder %s18, 0
      %p66 = por %p64, %p65
      %s67 = ssub.s32 %s12, %s19
      %p68 = scmp.eq.s32.totalorder %s67, 0
      %s70 = sadd.s32 %s69, 1
      %s71 = scalar_select %p68, %s69, %s70
      %p74 = pneg %p68
      %p75 = scmp.eq.s32.totalorder %s12, 1
      %p76 = por %p74, %p75
      %p77 = scmp.ne.s32.totalorder %s69, %s72
      %p78 = scmp.eq.s32.totalorder %s12, 0
      %p79 = por %p77, %p78
      %p80 = scmp.ne.s32.totalorder %s69, %s72
      %p81 = scmp.eq.s32.totalorder %s17, 1
      %p82 = por %p80, %p81
      %p83 = scmp.ne.s32.totalorder %s72, %s73
      %p84 = scmp.eq.s32.totalorder %s17, 0
      %p85 = por %p83, %p84
      %p86 = scmp.ne.s32.totalorder %s72, %s73
      %p87 = scmp.eq.s32.totalorder %s18, 1
      %p88 = por %p86, %p87
      %p90 = scmp.ne.s32.totalorder %s73, %s89
      %p91 = scmp.eq.s32.totalorder %s18, 0
      %p92 = por %p90, %p91
      %p93 = scmp.le.s32.totalorder 1, %s12
      %p94 = scmp.lt.s32.totalorder %s12, 3
      %p95 = pnand %p93, %p94
      %p96 = pneg %p95
      // Predicated region
      $region9: #{tpu_custom_call.1} parent=5 // pred_check
        _
      $region10: #{tpu_custom_call.1} parent=5 // pred_check_branch
        %98 = sbr.rel (%p95) target = $region12
      $region11: #{tpu_custom_call.1} parent=5 // pred_region
        %s99 = ssub.s32 %s12, 1
        // Predicated region
        $region13: #{tpu_custom_call.1} parent=11 // pred_check
          %p100 = pneg %p33
        $region14: #{tpu_custom_call.1} parent=11 // pred_check_branch
          %102 = sbr.rel (%p100) target = $region16
        $region15: #{tpu_custom_call.1} parent=11 // pred_region
          %s104 = ssub.s32 1728, 1728
          %105 = vsyncadd [#allocation3], %s104
          %s106 = sshll.u32 [#allocation2], 4
          %s107 = int_to_ptr.vmem [resolvable:$true] %s106
          %112 = dma.hbm_to_vmem [thread:$0]  %s0, 1728, %s107, [#allocation3], 64, 64, 4
        $region16: #{tpu_custom_call.1} parent=11 // pred_fallthru
          _
      $region12: #{tpu_custom_call.1} parent=5 // pred_fallthru
        _
      %p113 = scmp.lt.s32.totalorder %s12, 2
      // Predicated region
      $region17: #{tpu_custom_call.1} parent=5 // pred_check
        %p114 = pneg %p113
      $region18: #{tpu_custom_call.1} parent=5 // pred_check_branch
        %116 = sbr.rel (%p114) target = $region20
      $region19: #{tpu_custom_call.1} parent=5 // pred_region
        // Predicated region
        $region21: #{tpu_custom_call.1} parent=19 // pred_check
          %p117 = pneg %p53
        $region22: #{tpu_custom_call.1} parent=19 // pred_check_branch
          %119 = sbr.rel (%p117) target = $region24
        $region23: #{tpu_custom_call.1} parent=19 // pred_region
          %p120 = scmp.lt.s32.totalorder %s12, 1
          %s121 = scalar_select %p120, %s12, 1
          %s122 = smul.addr %s121, 3
          %s123 = smul.addr %s122, 4
          %s124 = scalar_lea.vmem %s1, %s123
        $region24: #{tpu_custom_call.1} parent=19 // pred_fallthru
          _
      $region20: #{tpu_custom_call.1} parent=5 // pred_fallthru
        _
      %p125 = scmp.le.s32.totalorder 1, %s12
      %p126 = scmp.lt.s32.totalorder %s12, 3
      %p127 = pnand %p125, %p126
      %p128 = pneg %p127
      // Predicated region
      $region25: #{tpu_custom_call.1} parent=5 // pred_check
        _
      $region26: #{tpu_custom_call.1} parent=5 // pred_check_branch
        %130 = sbr.rel (%p127) target = $region28
      $region27: #{tpu_custom_call.1} parent=5 // pred_region
        %s131 = ssub.s32 %s12, 1
        // Predicated region
        $region29: #{tpu_custom_call.1} parent=27 // pred_check
          %p132 = pneg %p33
        $region30: #{tpu_custom_call.1} parent=27 // pred_check_branch
          %134 = sbr.rel (%p132) target = $region32
        $region31: #{tpu_custom_call.1} parent=27 // pred_region
          %135 = dma.done [#allocation3], 1728
        $region32: #{tpu_custom_call.1} parent=27 // pred_fallthru
          _
        %p136 = pneg %p33
        %p137 = pneg %p30
        %p138 = scmp.lt.s32.totalorder %s17, 1
        %s139 = scalar_select %p138, %s17, 1
        %s140 = smul.addr %s139, 3
        %s141 = smul.addr %s140, 4
        %s142 = scalar_lea.vmem %s1, %s141
        %p143 = pneg %p59
        %p144 = pneg %p56
        %p145 = pneg %p85
        %p146 = pneg %p82
        %s147 = sand.u32 %s72, 1
        %s148 = scalar_lea.sflag [#allocation4], %s147
        %s149 = sand.u32 %s72, 1
        %s150 = smul.addr %s149, 16
        %s151 = scalar_lea.vmem [#allocation5], %s150
        %p152 = scmp.lt.s32.totalorder %s17, 1
        %s153 = scalar_select %p152, %s17, 1
        %s154 = smul.addr %s153, 3
        %s155 = smul.addr %s154, 4
        %s156 = scalar_lea.vmem %s1, %s155
        %v158 = vld [vmem:[%s156] sm:$0xf]
        %v159 = vld [vmem:[%s156 + $0x4] sm:$0xf]
        %v160 = vld [vmem:[#allocation2] sm:$0xf]
        %v161 = vld [vmem:[#allocation2 + $0x4] sm:$0xf]
        %v162 = vld [vmem:[#allocation2 + $0x8] sm:$0xf]
        %v163 = vld [vmem:[#allocation2 + $0xc] sm:$0xf]
        %v164 = vld [vmem:[#allocation2 + $0x10] sm:$0xf]
        %v165 = vld [vmem:[#allocation2 + $0x14] sm:$0xf]
        %v166 = vld [vmem:[#allocation2 + $0x18] sm:$0xf]
        %v167 = vld [vmem:[#allocation2 + $0x1c] sm:$0xf]
        %v168 = vld [vmem:[#allocation2 + $0x20] sm:$0xf]
        %v169 = vld [vmem:[%s156 + $0x8] sm:$0x1]
        %s170 = scalar_lea.vmem [#allocation2], 36
        %v171 = vld [vmem:[%s170] sm:$0xf]
        %v172 = vld [vmem:[%s170 + $0x4] sm:$0xf]
        %v173 = vld [vmem:[%s170 + $0x8] sm:$0xf]
        %v174 = vld [vmem:[%s170 + $0xc] sm:$0xf]
        %v175 = vld [vmem:[%s170 + $0x10] sm:$0xf]
        %v176 = vld [vmem:[%s170 + $0x14] sm:$0xf]
        %v177 = vld [vmem:[%s170 + $0x18] sm:$0xf]
        %v178 = vld [vmem:[%s170 + $0x1c] sm:$0xf]
        %v179 = vld [vmem:[%s170 + $0x20] sm:$0xf]
        %v183 = vunpack.c.l.b16 %v158
        %v184 = vunpack.c.l.b16 %v159
        %v185 = vunpack.c.l.b16 %v169
        %v186 = vpack.c.b16 %v184, %v183
        %v187 = vpack.c.b16 %v185, %v185
        %vm188 = vsmask.f32 7424
        %v190 = vshrl.u32 %v186, 16
        %v192 = vshll.u32 %v186, 16
        %v194 = vrot.slane %v192, 1
        %v195 = vor.u32 %v190, %v194
        %v197 = vshll.u32 %v187, 16
        %v199 = vrot.slane %v197, 1
        %v200 = vsel %vm188, %v195, %v199
        %v210 = vunpack.c.l.b16 %v171
        %v211 = vunpack.c.l.b16 %v172
        %v212 = vunpack.c.l.b16 %v173
        %v213 = vunpack.c.l.b16 %v174
        %v214 = vunpack.c.l.b16 %v175
        %v215 = vunpack.c.l.b16 %v176
        %v216 = vunpack.c.l.b16 %v177
        %v217 = vunpack.c.l.b16 %v178
        %v218 = vunpack.c.l.b16 %v179
        %v219 = vpack.c.b16 %v211, %v210
        %v220 = vpack.c.b16 %v213, %v212
        %v221 = vpack.c.b16 %v215, %v214
        %v222 = vpack.c.b16 %v217, %v216
        %v223 = vpack.c.b16 %v218, %v218
        %vm228 = vcmask 588800
        %v230 = vsel %vm228, %v200, 0
        %vm232 = vcmask 1043456
        %v234 = vsel %vm232, %v223, 0
        %236 = vmatprep.subr.bf16.mxu0 0
        %237 = vmatpush1.bf16.msra.mxu0 %v219
        %238 = vmatprep.subr.bf16.mxu0 0
        %239 = vmatpush1.bf16.msra.mxu0 %v220
        %240 = vmatprep.subr.bf16.mxu0 0
        %241 = vmatpush1.bf16.msra.mxu0 %v221
        %242 = vmatprep.subr.bf16.mxu0 0
        %243 = vmatpush1.bf16.msra.mxu0 %v222
        %244 = vmatprep.subr.bf16.mxu0 0
        %245 = vmatpush1.bf16.msra.mxu0 %v234
        %246 = vmatprep.subr.bf16.mxu0 0
        %247 = vmatpush1.bf16.msra.mxu0 0
        %248 = vmatprep.subr.bf16.mxu0 0
        %249 = vmatpush1.bf16.msra.mxu0 0
        %250 = vmatprep.subr.bf16.mxu0 0
        %251 = vmatpush1.bf16.msra.mxu0 0
        %252 = vmatprep.subr.bf16.mxu0 0
        %253 = vmatpush1.bf16.msra.mxu0 0
        %254 = vmatprep.subr.bf16.mxu0 0
        %255 = vmatpush1.bf16.msra.mxu0 0
        %256 = vmatprep.subr.bf16.mxu0 0
        %257 = vmatpush1.bf16.msra.mxu0 0
        %258 = vmatprep.subr.bf16.mxu0 0
        %259 = vmatpush1.bf16.msra.mxu0 0
        %260 = vmatprep.subr.bf16.mxu0 0
        %261 = vmatpush1.bf16.msra.mxu0 0
        %262 = vmatprep.subr.bf16.mxu0 0
        %263 = vmatpush1.bf16.msra.mxu0 0
        %264 = vmatprep.subr.bf16.mxu0 0
        %265 = vmatpush1.bf16.msra.mxu0 0
        %266 = vmatprep.subr.bf16.mxu0 0
        %267 = vmatpush1.bf16.msra.mxu0 0
        %268 = vmatprep.mubr.bf16.mxu0 0
        %269 = vmatmul.mubr.bf16.gmra.mrb[0].mxu0 %v230
        %v270 = vpop.f32.mrb[0].mxu0
        %v271 = vadd.f32 0.0, %v270
        %v272 = vpop.f32.mrb[0].mxu0
        %v273 = vpop.f32.mrb[0].mxu0
        %v274 = vadd.f32 0.0, %v273
        %v275 = vpop.f32.mrb[0].mxu0
        %276 = vdwg.mxu0
        %v286 = vunpack.c.l.b16 %v160
        %v287 = vunpack.c.l.b16 %v161
        %v288 = vunpack.c.l.b16 %v162
        %v289 = vunpack.c.l.b16 %v163
        %v290 = vunpack.c.l.b16 %v164
        %v291 = vunpack.c.l.b16 %v165
        %v292 = vunpack.c.l.b16 %v166
        %v293 = vunpack.c.l.b16 %v167
        %v294 = vunpack.c.l.b16 %v168
        %v295 = vpack.c.b16 %v287, %v286
        %v296 = vpack.c.b16 %v289, %v288
        %v297 = vpack.c.b16 %v291, %v290
        %v298 = vpack.c.b16 %v293, %v292
        %v299 = vpack.c.b16 %v294, %v294
        %v304 = vsel %vm228, %v186, 0
        %v307 = vsel %vm232, %v299, 0
        %309 = vmatprep.subr.bf16.mxu0 0
        %310 = vmatpush1.bf16.msra.mxu0 %v295
        %311 = vmatprep.subr.bf16.mxu0 0
        %312 = vmatpush1.bf16.msra.mxu0 %v296
        %313 = vmatprep.subr.bf16.mxu0 0
        %314 = vmatpush1.bf16.msra.mxu0 %v297
        %315 = vmatprep.subr.bf16.mxu0 0
        %316 = vmatpush1.bf16.msra.mxu0 %v298
        %317 = vmatprep.subr.bf16.mxu0 0
        %318 = vmatpush1.bf16.msra.mxu0 %v307
        %319 = vmatprep.subr.bf16.mxu0 0
        %320 = vmatpush1.bf16.msra.mxu0 0
        %321 = vmatprep.subr.bf16.mxu0 0
        %322 = vmatpush1.bf16.msra.mxu0 0
        %323 = vmatprep.subr.bf16.mxu0 0
        %324 = vmatpush1.bf16.msra.mxu0 0
        %325 = vmatprep.subr.bf16.mxu0 0
        %326 = vmatpush1.bf16.msra.mxu0 0
        %327 = vmatprep.subr.bf16.mxu0 0
        %328 = vmatpush1.bf16.msra.mxu0 0
        %329 = vmatprep.subr.bf16.mxu0 0
        %330 = vmatpush1.bf16.msra.mxu0 0
        %331 = vmatprep.subr.bf16.mxu0 0
        %332 = vmatpush1.bf16.msra.mxu0 0
        %333 = vmatprep.subr.bf16.mxu0 0
        %334 = vmatpush1.bf16.msra.mxu0 0
        %335 = vmatprep.subr.bf16.mxu0 0
        %336 = vmatpush1.bf16.msra.mxu0 0
        %337 = vmatprep.subr.bf16.mxu0 0
        %338 = vmatpush1.bf16.msra.mxu0 0
        %339 = vmatprep.subr.bf16.mxu0 0
        %340 = vmatpush1.bf16.msra.mxu0 0
        %341 = vmatprep.mubr.bf16.mxu0 0
        %342 = vmatmul.mubr.bf16.gmra.mrb[0].mxu0 %v304
        %v343 = vpop.f32.mrb[0].mxu0
        %v344 = vadd.f32 %v271, %v343
        %v345 = vpop.f32.mrb[0].mxu0
        %v346 = vpop.f32.mrb[0].mxu0
        %v347 = vadd.f32 %v274, %v346
        %v348 = vpop.f32.mrb[0].mxu0
        %349 = vdwg.mxu0
        %v350 = vld [vmem:[%s156] sm:$0xe]
        %s351 = scalar_lea.vmem [#allocation2], 72
        %v352 = vld [vmem:[%s351] sm:$0xf]
        %v353 = vld [vmem:[%s351 + $0x4] sm:$0xf]
        %v354 = vld [vmem:[%s351 + $0x8] sm:$0xf]
        %v355 = vld [vmem:[%s351 + $0xc] sm:$0xf]
        %v356 = vld [vmem:[%s351 + $0x10] sm:$0xf]
        %v357 = vld [vmem:[%s351 + $0x14] sm:$0xf]
        %v358 = vld [vmem:[%s351 + $0x18] sm:$0xf]
        %v359 = vld [vmem:[%s351 + $0x1c] sm:$0xf]
        %v360 = vld [vmem:[%s351 + $0x20] sm:$0xf]
        %v362 = vunpack.c.l.b16 %v350
        %v363 = vpack.c.b16 %v184, %v362
        %vm364 = vcmask 1046528
        %v365 = vrot.slane %v363, 1
        %v366 = vrot.slane %v187, 1
        %v367 = vsel %vm364, %v365, %v366
        %v377 = vunpack.c.l.b16 %v352
        %v378 = vunpack.c.l.b16 %v353
        %v379 = vunpack.c.l.b16 %v354
        %v380 = vunpack.c.l.b16 %v355
        %v381 = vunpack.c.l.b16 %v356
        %v382 = vunpack.c.l.b16 %v357
        %v383 = vunpack.c.l.b16 %v358
        %v384 = vunpack.c.l.b16 %v359
        %v385 = vunpack.c.l.b16 %v360
        %v386 = vpack.c.b16 %v378, %v377
        %v387 = vpack.c.b16 %v380, %v379
        %v388 = vpack.c.b16 %v382, %v381
        %v389 = vpack.c.b16 %v384, %v383
        %v390 = vpack.c.b16 %v385, %v385
        %v396 = vsel %vm228, %v367, 0
        %v399 = vsel %vm232, %v390, 0
        %401 = vmatprep.subr.bf16.mxu0 0
        %402 = vmatpush1.bf16.msra.mxu0 %v386
        %403 = vmatprep.subr.bf16.mxu0 0
        %404 = vmatpush1.bf16.msra.mxu0 %v387
        %405 = vmatprep.subr.bf16.mxu0 0
        %406 = vmatpush1.bf16.msra.mxu0 %v388
        %407 = vmatprep.subr.bf16.mxu0 0
        %408 = vmatpush1.bf16.msra.mxu0 %v389
        %409 = vmatprep.subr.bf16.mxu0 0
        %410 = vmatpush1.bf16.msra.mxu0 %v399
        %411 = vmatprep.subr.bf16.mxu0 0
        %412 = vmatpush1.bf16.msra.mxu0 0
        %413 = vmatprep.subr.bf16.mxu0 0
        %414 = vmatpush1.bf16.msra.mxu0 0
        %415 = vmatprep.subr.bf16.mxu0 0
        %416 = vmatpush1.bf16.msra.mxu0 0
        %417 = vmatprep.subr.bf16.mxu0 0
        %418 = vmatpush1.bf16.msra.mxu0 0
        %419 = vmatprep.subr.bf16.mxu0 0
        %420 = vmatpush1.bf16.msra.mxu0 0
        %421 = vmatprep.subr.bf16.mxu0 0
        %422 = vmatpush1.bf16.msra.mxu0 0
        %423 = vmatprep.subr.bf16.mxu0 0
        %424 = vmatpush1.bf16.msra.mxu0 0
        %425 = vmatprep.subr.bf16.mxu0 0
        %426 = vmatpush1.bf16.msra.mxu0 0
        %427 = vmatprep.subr.bf16.mxu0 0
        %428 = vmatpush1.bf16.msra.mxu0 0
        %429 = vmatprep.subr.bf16.mxu0 0
        %430 = vmatpush1.bf16.msra.mxu0 0
        %431 = vmatprep.subr.bf16.mxu0 0
        %432 = vmatpush1.bf16.msra.mxu0 0
        %433 = vmatprep.mubr.bf16.mxu0 0
        %434 = vmatmul.mubr.bf16.gmra.mrb[0].mxu0 %v396
        %v435 = vpop.f32.mrb[0].mxu0
        %v436 = vadd.f32 0.0, %v435
        %v437 = vpop.f32.mrb[0].mxu0
        %v438 = vpop.f32.mrb[0].mxu0
        %v439 = vadd.f32 0.0, %v438
        %v440 = vpop.f32.mrb[0].mxu0
        %441 = vdwg.mxu0
        %v442 = vadd.f32 %v344, %v436
        %v443 = vadd.f32 %v347, %v439
        %444 = vst [vmem:[%s151] sm:$0xff] %v442
        %445 = vst [vmem:[%s151 + $0x8] sm:$0xff] %v443
        %s446 = sand.u32 %s72, 1
        %s447 = scalar_lea.sflag [#allocation4], %s446
        %s448 = sand.u32 %s72, 1
        %s449 = smul.addr %s448, 16
        %s450 = scalar_lea.vmem [#allocation5], %s449
        // Predicated region
        $region33: #{tpu_custom_call.1} parent=27 // pred_check
          %p451 = pneg %p82
        $region34: #{tpu_custom_call.1} parent=27 // pred_check_branch
          %453 = sbr.rel (%p451) target = $region36
        $region35: #{tpu_custom_call.1} parent=27 // pred_region
          %s455 = ssub.s32 256, 256
          %456 = vsyncadd %s447, %s455
          %s457 = smul.addr %s17, 2
          %s458 = smul.addr %s457, 128
          %s459 = scalar_lea.hbm %s2, %s458
          %s460 = sshll.u32 %s450, 4
          %s461 = int_to_ptr.vmem [resolvable:$true] %s460
          %466 = dma.vmem_to_hbm [thread:$0]  %s461, 256, %s459, %s447, 128, 128, 8
        $region36: #{tpu_custom_call.1} parent=27 // pred_fallthru
          _
      $region28: #{tpu_custom_call.1} parent=5 // pred_fallthru
        _
      %p467 = scmp.le.s32.totalorder 2, %s12
      // Predicated region
      $region37: #{tpu_custom_call.1} parent=5 // pred_check
        %p468 = pneg %p467
      $region38: #{tpu_custom_call.1} parent=5 // pred_check_branch
        %470 = sbr.rel (%p468) target = $region40
      $region39: #{tpu_custom_call.1} parent=5 // pred_region
        %s471 = ssub.s32 %s12, 2
        // Predicated region
        $region41: #{tpu_custom_call.1} parent=39 // pred_check
          %p472 = pneg %p88
        $region42: #{tpu_custom_call.1} parent=39 // pred_check_branch
          %474 = sbr.rel (%p472) target = $region44
        $region43: #{tpu_custom_call.1} parent=39 // pred_region
          %s475 = sand.u32 %s73, 1
          %s476 = scalar_lea.sflag [#allocation4], %s475
          %s477 = sand.u32 %s73, 1
          %s478 = smul.addr %s477, 16
          %s479 = scalar_lea.vmem [#allocation5], %s478
          %480 = dma.done %s476, 256
        $region44: #{tpu_custom_call.1} parent=39 // pred_fallthru
          _
      $region40: #{tpu_custom_call.1} parent=5 // pred_fallthru
        _
    $region6: #{tpu_custom_call.1} parent=1 // loop_footer
      %s16 = sadd.s32 1, %s12
    $region7: #{tpu_custom_call.1} parent=1 // loop_footer_branch
      %11 = sbr.rel target = $region3
    $region8: #{tpu_custom_call.1} parent=1 // loop_exit
      _
    %481 = vsyncpa [#allocation3], 1
    %s482 = scalar_lea.sflag [#allocation3], 1
    %483 = vsyncpa %s482, 1
    %484 = vsyncpa [#allocation4], 1
    %s485 = scalar_lea.sflag [#allocation4], 1
    %486 = vsyncpa %s485, 1

</llo_original>
